<compile_context>
chip_gen: v7x
topology: tpu7x:2x2x1
jax: 0.10.0
libtpu: 0.0.40
codegen_flags: <defaults>
</compile_context>

<pallas_src>
import numpy as np
import jax
import jax.numpy as jnp
from jax import lax
from jax.experimental import pallas as pl
from jax.experimental.pallas import tpu as pltpu


def _round_up(x, m):
    return ((x + m - 1) // m) * m


_INPUT_STREAM_BUDGET = 24 * 1024 * 1024   # target bytes of double-buffered activation blocks


def _make_fused_head_kernel(num_pathways, inv_ls, l_sizes, chunk_ls, need_masks,
                            segments, act):
    """Fused pool + multi-head projection + activation kernel.

    Kernel refs (in order):
      x_0..x_{P-1}    : (block_n, C_p, chunk_L_p) activation chunks
      w_0..w_{P-1}    : (C_p, n_pad) pre-transposed weight slabs (all heads, lane-padded)
      b               : (1, n_pad)  concatenated, zero-padded biases
      out             : (block_n, n_pad) activated head outputs
      acc_0..acc_{P-1}: (block_n, C_p) f32 pooling accumulators (VMEM scratch)
    """
    P = num_pathways

    def kernel(*refs):
        x_refs = refs[:P]
        w_refs = refs[P:2 * P]
        b_ref = refs[2 * P]
        o_ref = refs[2 * P + 1]
        acc_refs = refs[2 * P + 2:]

        k = pl.program_id(1)

        @pl.when(k == 0)
        def _init():
            for acc in acc_refs:
                acc[...] = jnp.zeros_like(acc)

        # Chunked partial sums over the flattened T*H*W (lane) axis, f32 accumulation.
        for p in range(P):
            xc = x_refs[p][...].astype(jnp.float32)
            if need_masks[p]:
                lane = lax.broadcasted_iota(jnp.int32, xc.shape, 2)
                valid = (k * chunk_ls[p] + lane) < l_sizes[p]
                xc = jnp.where(valid, xc, 0.0)
            acc_refs[p][...] += jnp.sum(xc, axis=-1)

        @pl.when(k == pl.num_programs(1) - 1)
        def _finalize():
            # mean = sum * (1/L_p); fused projection of all heads (classes of every
            # head live on the lane axis -> lane-dense matmul + unmasked store).
            logits = None
            for p in range(P):
                feat_p = acc_refs[p][...] * inv_ls[p]
                part = jnp.dot(feat_p, w_refs[p][...],
                               preferred_element_type=jnp.float32)
                logits = part if logits is None else logits + part
            logits = logits + b_ref[...]

            if act == "softmax":
                # Per-head (segmented), numerically stable softmax.
                col = lax.broadcasted_iota(jnp.int32, logits.shape, 1)
                probs = jnp.zeros_like(logits)
                for off, n_h in segments:             # static unroll over heads
                    in_seg = jnp.logical_and(col >= off, col < off + n_h)
                    seg = jnp.where(in_seg, logits, -1e30)
                    m = jnp.max(seg, axis=-1, keepdims=True)
                    e = jnp.where(in_seg, jnp.exp(seg - m), 0.0)
                    s = jnp.sum(e, axis=-1, keepdims=True)
                    probs = probs + e * pl.reciprocal(s, approx=True)
                o_ref[...] = probs.astype(o_ref.dtype)
            elif act == "sigmoid":
                o_ref[...] = pl.reciprocal(1.0 + jnp.exp(-logits),
                                           approx=True).astype(o_ref.dtype)
            else:  # test_noact=True -> raw logits
                o_ref[...] = logits.astype(o_ref.dtype)

    return kernel


def prepare_multi_task_head_params(weights, biases, dim_in):
    """One-time parameter prep (outside the forward).

    weights: list of PyTorch-layout Linear weights, each (n_classes_i, sum(dim_in))
    biases : list of (n_classes_i,)
    Builds per-pathway, pre-transposed weight slabs whose class (lane) axis is the
    concatenation of all heads, zero-padded to a multiple of 128 lanes.
    """
    dim_in = [int(c) for c in dim_in]
    weights = [jnp.asarray(w) for w in weights]
    biases = [jnp.asarray(b) for b in biases]
    n_list = [int(w.shape[0]) for w in weights]
    n_total = sum(n_list)
    n_pad = _round_up(max(n_total, 1), 128)

    segments = []
    off = 0
    for n in n_list:
        segments.append((off, n))
        off += n

    w_slabs = []
    c_off = 0
    for c in dim_in:
        cols = [jnp.transpose(w[:, c_off:c_off + c]).astype(jnp.float32)
                for w in weights]                      # each (c, n_i)
        slab = jnp.concatenate(cols, axis=1)           # (c, n_total)
        slab = jnp.pad(slab, ((0, 0), (0, n_pad - n_total)))
        w_slabs.append(slab)
        c_off += c

    b_all = jnp.concatenate([b.astype(jnp.float32) for b in biases])
    b_pad = jnp.pad(b_all, (0, n_pad - n_total)).reshape(1, n_pad)

    return {
        "dim_in": tuple(dim_in),
        "w_slabs": w_slabs,
        "b_pad": b_pad,
        "segments": tuple(segments),
        "n_pad": n_pad,
    }


def _x_index_map(last_block):
    if last_block is None:
        return lambda i, k: (i, 0, k)
    lb = int(last_block)
    # Pathway needs fewer chunks than the shared grid: clamp (repeated block index
    # -> Pallas skips the re-DMA; the in-kernel mask zeroes the contribution).
    return lambda i, k: (i, 0, jnp.minimum(k, lb))


def multi_task_head_forward(inputs, params, *, act_func="softmax",
                            test_noact=False, target_chunk_l=None):
    """Fused eval-mode forward. inputs: list of (N, C_p, T_p, H_p, W_p)."""
    dim_in = params["dim_in"]
    w_slabs = params["w_slabs"]
    b_pad = params["b_pad"]
    segments = params["segments"]
    n_pad = params["n_pad"]

    P = len(inputs)
    assert P == len(dim_in), "Input tensor does not contain the expected pathways"
    N = int(inputs[0].shape[0])
    Cs = [int(x.shape[1]) for x in inputs]
    Ls = [int(np.prod(x.shape[2:])) for x in inputs]
    assert tuple(Cs) == tuple(dim_in), "pathway channel dims are not consistent"

    act = "none" if test_noact else act_func
    if act not in ("softmax", "sigmoid", "none"):
        raise NotImplementedError(
            "{} is not supported as an activation function.".format(act_func))

    x_flat = [x.reshape(N, c, l) for x, c, l in zip(inputs, Cs, Ls)]
    per_sample_bytes = sum(c * l * x.dtype.itemsize
                           for x, c, l in zip(x_flat, Cs, Ls))

    # ---- batch tile: grow while double-buffered activation blocks fit the budget ----
    if N <= 8:
        block_n = N
    else:
        bn = _INPUT_STREAM_BUDGET // max(1, 2 * per_sample_bytes)
        block_n = min(N, max(8, (bn // 8) * 8))

    # ---- L chunking: shared chunk count, 128-lane-aligned per-pathway chunks ----
    if target_chunk_l is None:
        n_chunks = max(1, pl.cdiv(2 * block_n * per_sample_bytes,
                                  _INPUT_STREAM_BUDGET))
    else:
        n_chunks = max(1, max(pl.cdiv(l, int(target_chunk_l)) for l in Ls))

    chunk_ls, need_masks, last_blocks = [], [], []
    for l in Ls:
        chunk = l if n_chunks == 1 else _round_up(pl.cdiv(l, n_chunks), 128)
        n_real = pl.cdiv(l, chunk)
        chunk_ls.append(chunk)
        need_masks.append(chunk * n_chunks != l)
        last_blocks.append(None if n_real == n_chunks else n_real - 1)

    # ---- explicit VMEM budget (double-buffered blocks + params + scratch) ----
    in_block_bytes = sum(block_n * c * cl * x.dtype.itemsize
                         for x, c, cl in zip(x_flat, Cs, chunk_ls))
    w_bytes = sum(c * n_pad * 4 for c in Cs) + n_pad * 4
    out_bytes = block_n * n_pad * 4
    scratch_bytes = sum(block_n * c * 4 for c in Cs)
    needed = 2 * in_block_bytes + 2 * w_bytes + 2 * out_bytes + scratch_bytes
    vmem_limit = int(min(max(2 * needed, 32 * 1024 * 1024), 64 * 1024 * 1024))

    kernel = _make_fused_head_kernel(
        P, tuple(1.0 / l for l in Ls), tuple(Ls), tuple(chunk_ls),
        tuple(need_masks), segments, act)

    grid_spec = pltpu.PrefetchScalarGridSpec(
        num_scalar_prefetch=0,
        grid=(pl.cdiv(N, block_n), n_chunks),
        in_specs=(
            [pl.BlockSpec((block_n, c, cl), _x_index_map(lb))
             for c, cl, lb in zip(Cs, chunk_ls, last_blocks)]
            + [pl.BlockSpec((c, n_pad), lambda i, k: (0, 0)) for c in Cs]
            + [pl.BlockSpec((1, n_pad), lambda i, k: (0, 0))]),
        out_specs=pl.BlockSpec((block_n, n_pad), lambda i, k: (i, 0)),
        scratch_shapes=[pltpu.VMEM((block_n, c), jnp.float32) for c in Cs],
    )

    out_pad = pl.pallas_call(
        kernel,
        out_shape=jax.ShapeDtypeStruct((N, n_pad), jnp.float32),
        grid_spec=grid_spec,
        compiler_params=pltpu.CompilerParams(
            dimension_semantics=("parallel", "arbitrary"),
            vmem_limit_bytes=vmem_limit),
    )(*x_flat, *w_slabs, b_pad)

    # Slice each head's columns back out of the lane-dense padded slab.
    return [out_pad[:, off:off + n] for off, n in segments]


def _reference_forward(inputs, weights, biases, act="softmax", test_noact=False):
    pooled = [jnp.mean(x.astype(jnp.float32), axis=(2, 3, 4)) for x in inputs]
    feat = jnp.concatenate(pooled, axis=1)
    outs = []
    for w, b in zip(weights, biases):
        logits = feat @ w.T.astype(jnp.float32) + b.astype(jnp.float32)
        if test_noact:
            outs.append(logits)
        elif act == "softmax":
            outs.append(jax.nn.softmax(logits, axis=-1))
        else:
            outs.append(jax.nn.sigmoid(logits))
    return outs


if __name__ == "__main__":
    key = jax.random.PRNGKey(0)
    N = 2
    dim_in = (16, 8)            # two pathways (SlowFast style)
    num_classes = (6, 4)        # two task heads
    D = sum(dim_in)

    k = jax.random.split(key, 6)
    # Pathway inputs (NCTHW); T*H*W deliberately NOT a multiple of 128 so the
    # masked-edge-block / clamped-block streaming paths are exercised.
    x0 = jax.random.normal(k[0], (N, dim_in[0], 4, 7, 8), jnp.float32)   # L = 224
    x1 = jax.random.normal(k[1], (N, dim_in[1], 8, 7, 8), jnp.float32)   # L = 448

    # Deterministic Linear params (PyTorch layout: weight (n, D), bias (n,))
    w0 = 0.1 * jax.random.normal(k[2], (num_classes[0], D), jnp.float32)
    b0 = 0.1 * jax.random.normal(k[3], (num_classes[0],), jnp.float32)
    w1 = 0.1 * jax.random.normal(k[4], (num_classes[1], D), jnp.float32)
    b1 = 0.1 * jax.random.normal(k[5], (num_classes[1],), jnp.float32)

    params = prepare_multi_task_head_params([w0, w1], [b0, b1], dim_in)

    # Softmax head (default config) across streaming configurations:
    #   None -> auto (single full block); 128 / 200 -> multi-chunk pipelined
    #   accumulation with masked partial edge blocks and clamped block indices.
    refs = _reference_forward([x0, x1], [w0, w1], [b0, b1], act="softmax")
    for target_l in (None, 128, 200):
        outs = multi_task_head_forward([x0, x1], params, target_chunk_l=target_l)
        outs = [jax.block_until_ready(o) for o in outs]
        for o, r, n in zip(outs, refs, num_classes):
            assert o.shape == (N, n), o.shape
            # tolerance accounts for the approximate EUP reciprocal in the softmax
            np.testing.assert_allclose(np.asarray(o), np.asarray(r),
                                       rtol=2e-3, atol=2e-3)

    # sigmoid activation path
    refs_sig = _reference_forward([x0, x1], [w0, w1], [b0, b1], act="sigmoid")
    outs = multi_task_head_forward([x0, x1], params, act_func="sigmoid")
    for o, r in zip(outs, refs_sig):
        np.testing.assert_allclose(np.asarray(jax.block_until_ready(o)),
                                   np.asarray(r), rtol=2e-3, atol=2e-3)

    # test_noact (raw logits) path
    refs_raw = _reference_forward([x0, x1], [w0, w1], [b0, b1], test_noact=True)
    outs = multi_task_head_forward([x0, x1], params, test_noact=True)
    for o, r in zip(outs, refs_raw):
        np.testing.assert_allclose(np.asarray(jax.block_until_ready(o)),
                                   np.asarray(r), rtol=2e-3, atol=2e-3)

    print("KERNEL_OK")
</pallas_src>

<mosaic_0001>
module attributes {stable_mosaic.version = 11 : i64} {
  func.func @kernel(%arg0: i32, %arg1: i32, %arg2: memref<2x16x224xf32, #tpu.memory_space<vmem>>, %arg3: memref<2x8x448xf32, #tpu.memory_space<vmem>>, %arg4: memref<16x128xf32, #tpu.memory_space<vmem>>, %arg5: memref<8x128xf32, #tpu.memory_space<vmem>>, %arg6: memref<1x128xf32, #tpu.memory_space<vmem>>, %arg7: memref<2x128xf32, #tpu.memory_space<vmem>>, %arg8: memref<2x16xf32, #tpu.memory_space<vmem>>, %arg9: memref<2x8xf32, #tpu.memory_space<vmem>>) attributes {dimension_semantics = [#tpu.dimension_semantics<parallel>, #tpu.dimension_semantics<arbitrary>], iteration_bounds = array<i64: 1, 1>, scalar_prefetch = 0 : i64, scratch_operands = 2 : i64, tpu.core_type = #tpu.core_type<tc>, window_params = [{transform_indices = @transform_0, window_bounds = array<i64: 2, 16, 224>}, {transform_indices = @transform_1, window_bounds = array<i64: 2, 8, 448>}, {pipeline_mode = #tpu.pipeline_mode<synchronous>, transform_indices = @transform_2, window_bounds = array<i64: 16, 128>}, {pipeline_mode = #tpu.pipeline_mode<synchronous>, transform_indices = @transform_3, window_bounds = array<i64: 8, 128>}, {pipeline_mode = #tpu.pipeline_mode<synchronous>, transform_indices = @transform_4, window_bounds = array<i64: 1, 128>}, {transform_indices = @transform_5, window_bounds = array<i64: 2, 128>}]} {
    %c0_i32 = arith.constant 0 : i32
    %0 = arith.cmpi eq, %arg1, %c0_i32 : i32
    %1 = arith.extui %0 : i1 to i32
    %c0_i32_0 = arith.constant 0 : i32
    %2 = arith.cmpi ne, %1, %c0_i32_0 : i32
    scf.if %2 {
      %cst_17 = arith.constant 0.000000e+00 : f32
      %16 = vector.broadcast %cst_17 : f32 to vector<2x16xf32>
      %c0_18 = arith.constant 0 : index
      %c0_19 = arith.constant 0 : index
      %17 = vector.load %arg8[%c0_18, %c0_19] : memref<2x16xf32, #tpu.memory_space<vmem>>, vector<2x16xf32>
      tpu.vector_store %arg8[%c0_18, %c0_19], %16 {strides = array<i32>} : memref<2x16xf32, #tpu.memory_space<vmem>>, vector<2x16xf32>,
      %cst_20 = arith.constant 0.000000e+00 : f32
      %18 = vector.broadcast %cst_20 : f32 to vector<2x8xf32>
      %c0_21 = arith.constant 0 : index
      %c0_22 = arith.constant 0 : index
      %19 = vector.load %arg9[%c0_21, %c0_22] : memref<2x8xf32, #tpu.memory_space<vmem>>, vector<2x8xf32>
      tpu.vector_store %arg9[%c0_21, %c0_22], %18 {strides = array<i32>} : memref<2x8xf32, #tpu.memory_space<vmem>>, vector<2x8xf32>,
    } else {
    }
    %c0 = arith.constant 0 : index
    %c0_1 = arith.constant 0 : index
    %c0_2 = arith.constant 0 : index
    %3 = vector.load %arg2[%c0, %c0_1, %c0_2] : memref<2x16x224xf32, #tpu.memory_space<vmem>>, vector<2x16x224xf32>
    %c0_3 = arith.constant 0 : index
    %c0_4 = arith.constant 0 : index
    %4 = vector.load %arg8[%c0_3, %c0_4] : memref<2x16xf32, #tpu.memory_space<vmem>>, vector<2x16xf32>
    %cst = arith.constant dense<0.000000e+00> : vector<2x16xf32>
    %5 = vector.multi_reduction <add>, %3, %cst [2] : vector<2x16x224xf32> to vector<2x16xf32>
    %6 = arith.addf %4, %5 : vector<2x16xf32>
    %c0_5 = arith.constant 0 : index
    %c0_6 = arith.constant 0 : index
    %7 = vector.load %arg8[%c0_5, %c0_6] : memref<2x16xf32, #tpu.memory_space<vmem>>, vector<2x16xf32>
    tpu.vector_store %arg8[%c0_5, %c0_6], %6 {strides = array<i32>} : memref<2x16xf32, #tpu.memory_space<vmem>>, vector<2x16xf32>,
    %c0_7 = arith.constant 0 : index
    %c0_8 = arith.constant 0 : index
    %c0_9 = arith.constant 0 : index
    %8 = vector.load %arg3[%c0_7, %c0_8, %c0_9] : memref<2x8x448xf32, #tpu.memory_space<vmem>>, vector<2x8x448xf32>
    %c0_10 = arith.constant 0 : index
    %c0_11 = arith.constant 0 : index
    %9 = vector.load %arg9[%c0_10, %c0_11] : memref<2x8xf32, #tpu.memory_space<vmem>>, vector<2x8xf32>
    %cst_12 = arith.constant dense<0.000000e+00> : vector<2x8xf32>
    %10 = vector.multi_reduction <add>, %8, %cst_12 [2] : vector<2x8x448xf32> to vector<2x8xf32>
    %11 = arith.addf %9, %10 : vector<2x8xf32>
    %c0_13 = arith.constant 0 : index
    %c0_14 = arith.constant 0 : index
    %12 = vector.load %arg9[%c0_13, %c0_14] : memref<2x8xf32, #tpu.memory_space<vmem>>, vector<2x8xf32>
    tpu.vector_store %arg9[%c0_13, %c0_14], %11 {strides = array<i32>} : memref<2x8xf32, #tpu.memory_space<vmem>>, vector<2x8xf32>,
    %c0_i32_15 = arith.constant 0 : i32
    %13 = arith.cmpi eq, %arg1, %c0_i32_15 : i32
    %14 = arith.extui %13 : i1 to i32
    %c0_i32_16 = arith.constant 0 : i32
    %15 = arith.cmpi ne, %14, %c0_i32_16 : i32
    scf.if %15 {
      %c0_17 = arith.constant 0 : index
      %c0_18 = arith.constant 0 : index
      %16 = vector.load %arg8[%c0_17, %c0_18] : memref<2x16xf32, #tpu.memory_space<vmem>>, vector<2x16xf32>
      %cst_19 = arith.constant 0.00446428591 : f32
      %17 = vector.broadcast %cst_19 : f32 to vector<2x16xf32>
      %18 = arith.mulf %16, %17 : vector<2x16xf32>
      %c0_20 = arith.constant 0 : index
      %c0_21 = arith.constant 0 : index
      %19 = vector.load %arg4[%c0_20, %c0_21] : memref<16x128xf32, #tpu.memory_space<vmem>>, vector<16x128xf32>
      %cst_22 = arith.constant dense<0.000000e+00> : vector<2x128xf32>
      %20 = tpu.matmul %18, %19, %cst_22 {dimension_numbers = #tpu.dot_dimension_numbers<[1], [0], [0], [1], [0, 0, 1, 1], [], []>} : vector<2x16xf32>, vector<16x128xf32>, vector<2x128xf32> -> vector<2x128xf32>
      %c0_23 = arith.constant 0 : index
      %c0_24 = arith.constant 0 : index
      %21 = vector.load %arg9[%c0_23, %c0_24] : memref<2x8xf32, #tpu.memory_space<vmem>>, vector<2x8xf32>
      %cst_25 = arith.constant 0.00223214296 : f32
      %22 = vector.broadcast %cst_25 : f32 to vector<2x8xf32>
      %23 = arith.mulf %21, %22 : vector<2x8xf32>
      %c0_26 = arith.constant 0 : index
      %c0_27 = arith.constant 0 : index
      %24 = vector.load %arg5[%c0_26, %c0_27] : memref<8x128xf32, #tpu.memory_space<vmem>>, vector<8x128xf32>
      %cst_28 = arith.constant dense<0.000000e+00> : vector<2x128xf32>
      %25 = tpu.matmul %23, %24, %cst_28 {dimension_numbers = #tpu.dot_dimension_numbers<[1], [0], [0], [1], [0, 0, 1, 1], [], []>} : vector<2x8xf32>, vector<8x128xf32>, vector<2x128xf32> -> vector<2x128xf32>
      %26 = arith.addf %20, %25 : vector<2x128xf32>
      %c0_29 = arith.constant 0 : index
      %c0_30 = arith.constant 0 : index
      %27 = vector.load %arg6[%c0_29, %c0_30] : memref<1x128xf32, #tpu.memory_space<vmem>>, vector<1x128xf32>
      %28 = vector.broadcast %27 : vector<1x128xf32> to vector<2x128xf32>
      %29 = arith.addf %26, %28 : vector<2x128xf32>
      %30 = tpu.iota {dimensions = array<i32: 1>} : vector<2x128xi32>
      %cst_31 = arith.constant 0.000000e+00 : f32
      %31 = vector.broadcast %cst_31 : f32 to vector<2x128xf32>
      %c0_i32_32 = arith.constant 0 : i32
      %32 = vector.broadcast %c0_i32_32 : i32 to vector<2x128xi32>
      %33 = arith.cmpi sge, %30, %32 : vector<2x128xi32>
      %c6_i32 = arith.constant 6 : i32
      %34 = vector.broadcast %c6_i32 : i32 to vector<2x128xi32>
      %35 = arith.cmpi slt, %30, %34 : vector<2x128xi32>
      %36 = arith.andi %33, %35 : vector<2x128xi1>
      %cst_33 = arith.constant -1.000000e+30 : f32
      %37 = vector.broadcast %cst_33 : f32 to vector<2x128xf32>
      %38 = arith.select %36, %29, %37 : vector<2x128xi1>, vector<2x128xf32>
      %cst_34 = arith.constant dense<0xFF800000> : vector<2xf32>
      %39 = vector.multi_reduction <maximumf>, %38, %cst_34 [1] : vector<2x128xf32> to vector<2xf32>
      %40 = vector.shape_cast %39 : vector<2xf32> to vector<2x1xf32>
      %41 = vector.broadcast %40 : vector<2x1xf32> to vector<2x128xf32>
      %42 = arith.subf %38, %41 : vector<2x128xf32>
      %43 = math.exp %42 : vector<2x128xf32>
      %cst_35 = arith.constant 0.000000e+00 : f32
      %44 = vector.broadcast %cst_35 : f32 to vector<2x128xf32>
      %45 = arith.select %36, %43, %44 : vector<2x128xi1>, vector<2x128xf32>
      %cst_36 = arith.constant dense<0.000000e+00> : vector<2xf32>
      %46 = vector.multi_reduction <add>, %45, %cst_36 [1] : vector<2x128xf32> to vector<2xf32>
      %47 = vector.shape_cast %46 : vector<2xf32> to vector<2x1xf32>
      %48 = tpu.reciprocal %47 {approx = true} : vector<2x1xf32> -> vector<2x1xf32>
      %49 = vector.broadcast %48 : vector<2x1xf32> to vector<2x128xf32>
      %50 = arith.mulf %45, %49 : vector<2x128xf32>
      %51 = arith.addf %31, %50 : vector<2x128xf32>
      %c6_i32_37 = arith.constant 6 : i32
      %52 = vector.broadcast %c6_i32_37 : i32 to vector<2x128xi32>
      %53 = arith.cmpi sge, %30, %52 : vector<2x128xi32>
      %c10_i32 = arith.constant 10 : i32
      %54 = vector.broadcast %c10_i32 : i32 to vector<2x128xi32>
      %55 = arith.cmpi slt, %30, %54 : vector<2x128xi32>
      %56 = arith.andi %53, %55 : vector<2x128xi1>
      %cst_38 = arith.constant -1.000000e+30 : f32
      %57 = vector.broadcast %cst_38 : f32 to vector<2x128xf32>
      %58 = arith.select %56, %29, %57 : vector<2x128xi1>, vector<2x128xf32>
      %cst_39 = arith.constant dense<0xFF800000> : vector<2xf32>
      %59 = vector.multi_reduction <maximumf>, %58, %cst_39 [1] : vector<2x128xf32> to vector<2xf32>
      %60 = vector.shape_cast %59 : vector<2xf32> to vector<2x1xf32>
      %61 = vector.broadcast %60 : vector<2x1xf32> to vector<2x128xf32>
      %62 = arith.subf %58, %61 : vector<2x128xf32>
      %63 = math.exp %62 : vector<2x128xf32>
      %cst_40 = arith.constant 0.000000e+00 : f32
      %64 = vector.broadcast %cst_40 : f32 to vector<2x128xf32>
      %65 = arith.select %56, %63, %64 : vector<2x128xi1>, vector<2x128xf32>
      %cst_41 = arith.constant dense<0.000000e+00> : vector<2xf32>
      %66 = vector.multi_reduction <add>, %65, %cst_41 [1] : vector<2x128xf32> to vector<2xf32>
      %67 = vector.shape_cast %66 : vector<2xf32> to vector<2x1xf32>
      %68 = tpu.reciprocal %67 {approx = true} : vector<2x1xf32> -> vector<2x1xf32>
      %69 = vector.broadcast %68 : vector<2x1xf32> to vector<2x128xf32>
      %70 = arith.mulf %65, %69 : vector<2x128xf32>
      %71 = arith.addf %51, %70 : vector<2x128xf32>
      %c0_42 = arith.constant 0 : index
      %c0_43 = arith.constant 0 : index
      %72 = vector.load %arg7[%c0_42, %c0_43] : memref<2x128xf32, #tpu.memory_space<vmem>>, vector<2x128xf32>
      tpu.vector_store %arg7[%c0_42, %c0_43], %71 {strides = array<i32>} : memref<2x128xf32, #tpu.memory_space<vmem>>, vector<2x128xf32>,
    } else {
    }
    return
  }
  func.func @transform_0(%arg0: i32, %arg1: i32) -> (i32, i32, i32) {
    %c0_i32 = arith.constant 0 : i32
    %c0_i32_0 = arith.constant 0 : i32
    return %arg0, %c0_i32, %arg1 : i32, i32, i32
  }
  func.func @transform_1(%arg0: i32, %arg1: i32) -> (i32, i32, i32) {
    %c0_i32 = arith.constant 0 : i32
    %c0_i32_0 = arith.constant 0 : i32
    return %arg0, %c0_i32, %arg1 : i32, i32, i32
  }
  func.func @transform_2(%arg0: i32, %arg1: i32) -> (i32, i32) {
    %c0_i32 = arith.constant 0 : i32
    %c0_i32_0 = arith.constant 0 : i32
    %c0_i32_1 = arith.constant 0 : i32
    return %c0_i32, %c0_i32_0 : i32, i32
  }
  func.func @transform_3(%arg0: i32, %arg1: i32) -> (i32, i32) {
    %c0_i32 = arith.constant 0 : i32
    %c0_i32_0 = arith.constant 0 : i32
    %c0_i32_1 = arith.constant 0 : i32
    return %c0_i32, %c0_i32_0 : i32, i32
  }
  func.func @transform_4(%arg0: i32, %arg1: i32) -> (i32, i32) {
    %c0_i32 = arith.constant 0 : i32
    %c0_i32_0 = arith.constant 0 : i32
    %c0_i32_1 = arith.constant 0 : i32
    return %c0_i32, %c0_i32_0 : i32, i32
  }
  func.func @transform_5(%arg0: i32, %arg1: i32) -> (i32, i32) {
    %c0_i32 = arith.constant 0 : i32
    %c0_i32_0 = arith.constant 0 : i32
    return %arg0, %c0_i32 : i32, i32
  }
}

</mosaic_0001>

<llo_original>
// kernel: tpu_custom_call.1
$region0: #{tpu_custom_call.1}
  #allocation0 [shape = 'u32[]', space=smem, size = 0x4, offset = 0x4, fixed_abs, tag = 'smem constant byte address 0x4 - core index']
  #allocation1 [shape = 'u32[144,128]{1,0:T(1,128)}', space=vmem, size = 0x12000, scoped, tag = 'internal scratch']
  #allocation2 [shape = 'f32[2,16]{1,0:T(2,128)}', space=vmem, size = 0x400, scoped, tag = 'scratch operand']
  #allocation3 [shape = 'f32[2,8]{1,0:T(2,128)}', space=vmem, size = 0x400, scoped, tag = 'scratch operand']
  %s0 = inlined_call_operand.hbm [shape: f32[2,16,224], index: 0, kind: input, shape index: {}]
  %s1 = inlined_call_operand.hbm [shape: f32[2,8,448], index: 1, kind: input, shape index: {}]
  %s2 = inlined_call_operand.hbm [shape: f32[16,128], index: 2, kind: input, shape index: {}]
  %s3 = inlined_call_operand.vmem [shape: f32[8,128], index: 3, kind: input, shape index: {}]
  %s4 = inlined_call_operand.vmem [shape: f32[1,128], index: 4, kind: input, shape index: {}]
  %s5 = inlined_call_operand.hbm [shape: f32[2,128], index: 5, kind: output, shape index: {}]
  %s6 = sld [smem:[#allocation0]]
  $region50: #{tpu_custom_call.1} parent=0
    _
  %s8 = ssub.s32 1, %s6
  %s9 = scalar_select 0, %s8, %s6
  $region1: #{tpu_custom_call.1} parent=0
    #allocation4 [shape = 'u8[32768]{0}', space=vmem, size = 0x8000, scoped, tag = 'input window, operand 0, single buffered']
    #allocation5 [shape = 's32[1]{0}', space=sflag, size = 0x4, scoped, tag = 'scoped memory for tpu_custom_call.1']
    #allocation6 [shape = 's32[1]{0}', space=sflag, size = 0x4, scoped, tag = 'scoped memory for tpu_custom_call.1']
    #allocation7 [shape = 'u8[32768]{0}', space=vmem, size = 0x8000, scoped, tag = 'input window, operand 1, single buffered']
    #allocation8 [shape = 's32[1]{0}', space=sflag, size = 0x4, scoped, tag = 'scoped memory for tpu_custom_call.1']
    #allocation9 [shape = 'u8[8192]{0}', space=vmem, size = 0x2000, scoped, tag = 'input window, operand 2, single buffered']
    #allocation10 [shape = 'u8[1024]{0}', space=vmem, size = 0x400, scoped, tag = 'output window, operand 0, single buffered']
    %10 = vsyncpa [#allocation5], 0
    %11 = vsyncpa [#allocation8], 0
    %12 = vsyncpa [#allocation6], 0
    // Predicated region
    $region2: #{tpu_custom_call.1} parent=1 // pred_check
      _
    $region3: #{tpu_custom_call.1} parent=1 // pred_check_branch
      %14 = sbr.rel (0) target = $region5
    $region4: #{tpu_custom_call.1} parent=1 // pred_region
      %s16 = ssub.s32 1024, 1024
      %17 = vsyncadd [#allocation5], %s16
      %s18 = sshll.u32 [#allocation4], 4
      %s19 = int_to_ptr.vmem [resolvable:$true] %s18
      %24 = dma.hbm_to_vmem [thread:$0]  %s0, 1024, %s19, [#allocation5], 256, 256, 16
    $region5: #{tpu_custom_call.1} parent=1 // pred_fallthru
      _
    // Predicated region
    $region6: #{tpu_custom_call.1} parent=1 // pred_check
      _
    $region7: #{tpu_custom_call.1} parent=1 // pred_check_branch
      %26 = sbr.rel (0) target = $region9
    $region8: #{tpu_custom_call.1} parent=1 // pred_region
      %s28 = ssub.s32 1024, 1024
      %29 = vsyncadd [#allocation8], %s28
      %s30 = sshll.u32 [#allocation7], 4
      %s31 = int_to_ptr.vmem [resolvable:$true] %s30
      %36 = dma.hbm_to_vmem [thread:$0]  %s1, 1024, %s31, [#allocation8], 512, 512, 32
    $region9: #{tpu_custom_call.1} parent=1 // pred_fallthru
      _
    // Predicated region
    $region10: #{tpu_custom_call.1} parent=1 // pred_check
      _
    $region11: #{tpu_custom_call.1} parent=1 // pred_check_branch
      %38 = sbr.rel (0) target = $region13
    $region12: #{tpu_custom_call.1} parent=1 // pred_region
      %s40 = ssub.s32 256, 256
      %41 = vsyncadd [#allocation8], %s40
      %s42 = sshll.u32 [#allocation9], 4
      %s43 = int_to_ptr.vmem [resolvable:$true] %s42
      %48 = dma.hbm_to_vmem [thread:$0]  %s2, 256, %s43, [#allocation8], 128, 128, 8
    $region13: #{tpu_custom_call.1} parent=1 // pred_fallthru
      _
    // Predicated region
    $region14: #{tpu_custom_call.1} parent=1 // pred_check
      _
    $region15: #{tpu_custom_call.1} parent=1 // pred_check_branch
      %50 = sbr.rel (0) target = $region17
    $region16: #{tpu_custom_call.1} parent=1 // pred_region
      _
    $region17: #{tpu_custom_call.1} parent=1 // pred_fallthru
      _
    // Predicated region
    $region18: #{tpu_custom_call.1} parent=1 // pred_check
      _
    $region19: #{tpu_custom_call.1} parent=1 // pred_check_branch
      %52 = sbr.rel (0) target = $region21
    $region20: #{tpu_custom_call.1} parent=1 // pred_region
      _
    $region21: #{tpu_custom_call.1} parent=1 // pred_fallthru
      _
    // Predicated region
    $region22: #{tpu_custom_call.1} parent=1 // pred_check
      _
    $region23: #{tpu_custom_call.1} parent=1 // pred_check_branch
      %54 = sbr.rel (0) target = $region25
    $region24: #{tpu_custom_call.1} parent=1 // pred_region
      %55 = dma.done [#allocation5], 1024
    $region25: #{tpu_custom_call.1} parent=1 // pred_fallthru
      _
    // Predicated region
    $region26: #{tpu_custom_call.1} parent=1 // pred_check
      _
    $region27: #{tpu_custom_call.1} parent=1 // pred_check_branch
      %57 = sbr.rel (0) target = $region29
    $region28: #{tpu_custom_call.1} parent=1 // pred_region
      %58 = dma.done [#allocation8], 1024
    $region29: #{tpu_custom_call.1} parent=1 // pred_fallthru
      _
    // Predicated region
    $region30: #{tpu_custom_call.1} parent=1 // pred_check
      _
    $region31: #{tpu_custom_call.1} parent=1 // pred_check_branch
      %60 = sbr.rel (0) target = $region33
    $region32: #{tpu_custom_call.1} parent=1 // pred_region
      %61 = dma.done [#allocation8], 256
    $region33: #{tpu_custom_call.1} parent=1 // pred_fallthru
      _
    %p62 = scmp.eq.s32.totalorder 0, 0
    // Predicated region
    $region34: #{tpu_custom_call.1} parent=1 // pred_check
      %p63 = pneg %p62
    $region35: #{tpu_custom_call.1} parent=1 // pred_check_branch
      %65 = sbr.rel (%p63) target = $region37
    $region36: #{tpu_custom_call.1} parent=1 // pred_region
      %vm66 = vcmask 123904
      %67 = vst.msk [vmem:[#allocation2] sm:$0x3] %vm66, 0.0
      %vm68 = vcmask 58368
      %69 = vst.msk [vmem:[#allocation3] sm:$0x3] %vm68, 0.0
    $region37: #{tpu_custom_call.1} parent=1 // pred_fallthru
      _
    %v70 = vld [vmem:[#allocation4] sm:$0xff]
    %v71 = vld [vmem:[#allocation4 + $0x8] sm:$0xff]
    %v72 = vld [vmem:[#allocation4 + $0x10] sm:$0xff]
    %v73 = vld [vmem:[#allocation4 + $0x18] sm:$0xff]
    %v74 = vld [vmem:[#allocation4 + $0x20] sm:$0xff]
    %v75 = vld [vmem:[#allocation4 + $0x28] sm:$0xff]
    %v76 = vld [vmem:[#allocation4 + $0x30] sm:$0xff]
    %v77 = vld [vmem:[#allocation4 + $0x38] sm:$0xff]
    %v78 = vld [vmem:[#allocation2] sm:$0x3]
    %vm79 = vcmask 785408
    %v80 = vsel %vm79, %v71, 0.0
    %v81 = vadd.f32 %v70, %v80
    %82 = vadd.xlane.f32.xlu0 %v81
    %v83 = vpop.xlane.xlu0 %82
    %v84 = vsel %vm79, %v73, 0.0
    %v85 = vadd.f32 %v72, %v84
    %86 = vadd.xlane.f32.xlu0 %v85
    %v87 = vpop.xlane.xlu0 %86
    %v88 = vsel %vm79, %v75, 0.0
    %v89 = vadd.f32 %v74, %v88
    %90 = vadd.xlane.f32.xlu0 %v89
    %v91 = vpop.xlane.xlu0 %90
    %v92 = vsel %vm79, %v77, 0.0
    %v93 = vadd.f32 %v76, %v92
    %94 = vadd.xlane.f32.xlu0 %v93
    %v95 = vpop.xlane.xlu0 %94
    %v100 = vlaneseq
    %v101 = vand.u32 %v100, 127
    %v102 = vlaneseq
    %v103 = vshrl.u32 %v102, 7
    %v104 = vsub.s32 %v101, %v103
    %v105 = vrot.slane %v83, %v104
    %v106 = vadd.s32 %v101, 4294967288
    %v107 = vlaneseq
    %v108 = vshrl.u32 %v107, 7
    %v109 = vsub.s32 %v106, %v108
    %v110 = vrot.slane %v87, %v109
    %vm111 = vcmask 130112
    %v112 = vsel %vm111, %v110, %v105
    %v113 = vlaneseq
    %v114 = vshrl.u32 %v113, 7
    %v115 = vsub.s32 %v101, %v114
    %v116 = vrot.slane %v91, %v115
    %v117 = vlaneseq
    %v118 = vshrl.u32 %v117, 7
    %v119 = vsub.s32 %v106, %v118
    %v120 = vrot.slane %v95, %v119
    %v121 = vsel %vm111, %v120, %v116
    %vm122 = vcmask 1041409
    %v123 = vsel %vm122, %v121, %v112
    %v125 = vadd.f32 %v78, %v123
    %vm126 = vcmask 123904
    %127 = vst.msk [vmem:[#allocation2] sm:$0x3] %vm126, %v125
    %v128 = vld [vmem:[#allocation7] sm:$0xff]
    %v129 = vld [vmem:[#allocation7 + $0x8] sm:$0xff]
    %v130 = vld [vmem:[#allocation7 + $0x10] sm:$0xff]
    %v131 = vld [vmem:[#allocation7 + $0x18] sm:$0xff]
    %v132 = vld [vmem:[#allocation7 + $0x20] sm:$0xff]
    %v133 = vld [vmem:[#allocation7 + $0x28] sm:$0xff]
    %v134 = vld [vmem:[#allocation7 + $0x30] sm:$0xff]
    %v135 = vld [vmem:[#allocation7 + $0x38] sm:$0xff]
    %v136 = vld [vmem:[#allocation3] sm:$0x3]
    %v137 = vadd.f32 %v128, %v129
    %v138 = vadd.f32 %v137, %v130
    %vm139 = vcmask 523264
    %v140 = vsel %vm139, %v131, 0.0
    %v141 = vadd.f32 %v138, %v140
    %142 = vadd.xlane.f32.xlu0 %v141
    %v143 = vpop.xlane.xlu0 %142
    %v144 = vadd.f32 %v132, %v133
    %v145 = vadd.f32 %v144, %v134
    %v146 = vsel %vm139, %v135, 0.0
    %v147 = vadd.f32 %v145, %v146
    %148 = vadd.xlane.f32.xlu0 %v147
    %v149 = vpop.xlane.xlu0 %148
    %v152 = vlaneseq
    %v153 = vshrl.u32 %v152, 7
    %v154 = vsub.s32 %v101, %v153
    %v155 = vrot.slane %v143, %v154
    %v156 = vlaneseq
    %v157 = vshrl.u32 %v156, 7
    %v158 = vsub.s32 %v101, %v157
    %v159 = vrot.slane %v149, %v158
    %v160 = vsel %vm122, %v159, %v155
    %v162 = vadd.f32 %v136, %v160
    %vm163 = vcmask 58368
    %164 = vst.msk [vmem:[#allocation3] sm:$0x3] %vm163, %v162
    // Predicated region
    $region38: #{tpu_custom_call.1} parent=1 // pred_check
      %p165 = pneg %p62
    $region39: #{tpu_custom_call.1} parent=1 // pred_check_branch
      %167 = sbr.rel (%p165) target = $region41
    $region40: #{tpu_custom_call.1} parent=1 // pred_region
      %v168 = vld [vmem:[#allocation2] sm:$0x3]
      %v169 = vmul.f32 %v168, 0.004464286
      %v170 = vld [vmem:[#allocation9] sm:$0xff]
      %v171 = vld [vmem:[#allocation9 + $0x8] sm:$0xff]
      %v172 = vld [vmem:[#allocation3] sm:$0x3]
      %v173 = vmul.f32 %v172, 0.002232143
      %v174 = vld [vmem:[%s3] sm:$0xff]
      %vm175 = vcmask 64512
      %v177 = vsel %vm175, %v173, 0
      %179 = vmatprep.subr.mxu0 0.0
      %180 = vmatpush1.msra.mxu0 %v174
      %181 = vmatprep.subr.mxu0 0.0
      %182 = vmatpush1.msra.mxu0 0.0
      %183 = vmatprep.subr.mxu0 0.0
      %184 = vmatpush1.msra.mxu0 0.0
      %185 = vmatprep.subr.mxu0 0.0
      %186 = vmatpush1.msra.mxu0 0.0
      %187 = vmatprep.subr.mxu0 0.0
      %188 = vmatpush1.msra.mxu0 0.0
      %189 = vmatprep.subr.mxu0 0.0
      %190 = vmatpush1.msra.mxu0 0.0
      %191 = vmatprep.subr.mxu0 0.0
      %192 = vmatpush1.msra.mxu0 0.0
      %193 = vmatprep.subr.mxu0 0.0
      %194 = vmatpush1.msra.mxu0 0.0
      %195 = vmatprep.subr.mxu0 0.0
      %196 = vmatpush1.msra.mxu0 0.0
      %197 = vmatprep.subr.mxu0 0.0
      %198 = vmatpush1.msra.mxu0 0.0
      %199 = vmatprep.subr.mxu0 0.0
      %200 = vmatpush1.msra.mxu0 0.0
      %201 = vmatprep.subr.mxu0 0.0
      %202 = vmatpush1.msra.mxu0 0.0
      %203 = vmatprep.subr.mxu0 0.0
      %204 = vmatpush1.msra.mxu0 0.0
      %205 = vmatprep.subr.mxu0 0.0
      %206 = vmatpush1.msra.mxu0 0.0
      %207 = vmatprep.subr.mxu0 0.0
      %208 = vmatpush1.msra.mxu0 0.0
      %209 = vmatprep.subr.mxu0 0.0
      %210 = vmatpush1.msra.mxu0 0.0
      %211 = vmatprep.subr.mxu0 0.0
      %212 = vmatpush1.msra.mxu0 0.0
      %213 = vmatprep.subr.mxu0 0.0
      %214 = vmatpush1.msra.mxu0 0.0
      %215 = vmatprep.subr.mxu0 0.0
      %216 = vmatpush1.msra.mxu0 0.0
      %217 = vmatprep.subr.mxu0 0.0
      %218 = vmatpush1.msra.mxu0 0.0
      %219 = vmatprep.subr.mxu0 0.0
      %220 = vmatpush1.msra.mxu0 0.0
      %221 = vmatprep.subr.mxu0 0.0
      %222 = vmatpush1.msra.mxu0 0.0
      %223 = vmatprep.subr.mxu0 0.0
      %224 = vmatpush1.msra.mxu0 0.0
      %225 = vmatprep.subr.mxu0 0.0
      %226 = vmatpush1.msra.mxu0 0.0
      %227 = vmatprep.subr.mxu0 0.0
      %228 = vmatpush1.msra.mxu0 0.0
      %229 = vmatprep.subr.mxu0 0.0
      %230 = vmatpush1.msra.mxu0 0.0
      %231 = vmatprep.subr.mxu0 0.0
      %232 = vmatpush1.msra.mxu0 0.0
      %233 = vmatprep.subr.mxu0 0.0
      %234 = vmatpush1.msra.mxu0 0.0
      %235 = vmatprep.subr.mxu0 0.0
      %236 = vmatpush1.msra.mxu0 0.0
      %237 = vmatprep.subr.mxu0 0.0
      %238 = vmatpush1.msra.mxu0 0.0
      %239 = vmatprep.subr.mxu0 0.0
      %240 = vmatpush1.msra.mxu0 0.0
      %241 = vmatprep.subr.mxu0 0.0
      %242 = vmatpush1.msra.mxu0 0.0
      %243 = vmatprep.mubr.f32.mxu0 0.0
      %244 = vmatmul.mubr.f32.gmra.mrb[0].mxu0 %v177
      %v245 = vpop.f32.mrb[0].mxu0
      %v246 = vadd.f32 0.0, %v245
      %v247 = vpop.f32.mrb[0].mxu0
      %248 = vdwg.mxu0
      %vm249 = vcmask 130048
      %v251 = vsel %vm249, %v169, 0
      %253 = vmatprep.subr.mxu0 0.0
      %254 = vmatpush1.msra.mxu0 %v170
      %255 = vmatprep.subr.mxu0 0.0
      %256 = vmatpush1.msra.mxu0 %v171
      %257 = vmatprep.subr.mxu0 0.0
      %258 = vmatpush1.msra.mxu0 0.0
      %259 = vmatprep.subr.mxu0 0.0
      %260 = vmatpush1.msra.mxu0 0.0
      %261 = vmatprep.subr.mxu0 0.0
      %262 = vmatpush1.msra.mxu0 0.0
      %263 = vmatprep.subr.mxu0 0.0
      %264 = vmatpush1.msra.mxu0 0.0
      %265 = vmatprep.subr.mxu0 0.0
      %266 = vmatpush1.msra.mxu0 0.0
      %267 = vmatprep.subr.mxu0 0.0
      %268 = vmatpush1.msra.mxu0 0.0
      %269 = vmatprep.subr.mxu0 0.0
      %270 = vmatpush1.msra.mxu0 0.0
      %271 = vmatprep.subr.mxu0 0.0
      %272 = vmatpush1.msra.mxu0 0.0
      %273 = vmatprep.subr.mxu0 0.0
      %274 = vmatpush1.msra.mxu0 0.0
      %275 = vmatprep.subr.mxu0 0.0
      %276 = vmatpush1.msra.mxu0 0.0
      %277 = vmatprep.subr.mxu0 0.0
      %278 = vmatpush1.msra.mxu0 0.0
      %279 = vmatprep.subr.mxu0 0.0
      %280 = vmatpush1.msra.mxu0 0.0
      %281 = vmatprep.subr.mxu0 0.0
      %282 = vmatpush1.msra.mxu0 0.0
      %283 = vmatprep.subr.mxu0 0.0
      %284 = vmatpush1.msra.mxu0 0.0
      %285 = vmatprep.subr.mxu0 0.0
      %286 = vmatpush1.msra.mxu0 0.0
      %287 = vmatprep.subr.mxu0 0.0
      %288 = vmatpush1.msra.mxu0 0.0
      %289 = vmatprep.subr.mxu0 0.0
      %290 = vmatpush1.msra.mxu0 0.0
      %291 = vmatprep.subr.mxu0 0.0
      %292 = vmatpush1.msra.mxu0 0.0
      %293 = vmatprep.subr.mxu0 0.0
      %294 = vmatpush1.msra.mxu0 0.0
      %295 = vmatprep.subr.mxu0 0.0
      %296 = vmatpush1.msra.mxu0 0.0
      %297 = vmatprep.subr.mxu0 0.0
      %298 = vmatpush1.msra.mxu0 0.0
      %299 = vmatprep.subr.mxu0 0.0
      %300 = vmatpush1.msra.mxu0 0.0
      %301 = vmatprep.subr.mxu0 0.0
      %302 = vmatpush1.msra.mxu0 0.0
      %303 = vmatprep.subr.mxu0 0.0
      %304 = vmatpush1.msra.mxu0 0.0
      %305 = vmatprep.subr.mxu0 0.0
      %306 = vmatpush1.msra.mxu0 0.0
      %307 = vmatprep.subr.mxu0 0.0
      %308 = vmatpush1.msra.mxu0 0.0
      %309 = vmatprep.subr.mxu0 0.0
      %310 = vmatpush1.msra.mxu0 0.0
      %311 = vmatprep.subr.mxu0 0.0
      %312 = vmatpush1.msra.mxu0 0.0
      %313 = vmatprep.subr.mxu0 0.0
      %314 = vmatpush1.msra.mxu0 0.0
      %315 = vmatprep.subr.mxu0 0.0
      %316 = vmatpush1.msra.mxu0 0.0
      %317 = vmatprep.mubr.f32.mxu0 0.0
      %318 = vmatmul.mubr.f32.gmra.mrb[0].mxu0 %v251
      %v319 = vpop.f32.mrb[0].mxu0
      %v320 = vadd.f32 %v246, %v319
      %v321 = vpop.f32.mrb[0].mxu0
      %322 = vdwg.mxu0
      %v323 = vld [vmem:[%s4] sm:$0x1]
      %v325 = vlaneseq
      %v326 = vshrl.u32 %v325, 7
      %v327 = vsub.s32 0, %v326
      %v328 = vrot.slane %v323, %v327
      %v330 = vadd.f32 %v320, %v328
      %vm331 = vcmp.ge.s32.totalorder %v101, 0
      %vm332 = vcmp.lt.s32.totalorder %v101, 6
      %vm333 = vmand %vm331, %vm332
      %v334 = vsel %vm333, %v330, -1e+30
      %vm335 = vcmask 1041408
      %v336 = vsel %vm335, %v334, -inf
      %337 = vmax.xlane.f32.xlu0 %v336
      %v338 = vpop.xlane.xlu0 %337
      %v339 = vsub.f32 %v334, %v338
      %v340 = vmul.f32 %v339, 1.442695
      %v341 = vpow.pop %v340
      %v342 = vsel %vm333, %v341, 0.0
      %v343 = vsel %vm335, %v342, 0.0
      %344 = vadd.xlane.f32.xlu0 %v343
      %v345 = vpop.xlane.xlu0 %344
      %v346 = vrcp.pop %v345
      %v347 = vmul.f32 %v342, %v346
      %v348 = vadd.f32 %v347, 0.0
      %vm349 = vcmp.ge.s32.totalorder %v101, 6
      %vm350 = vcmp.lt.s32.totalorder %v101, 10
      %vm351 = vmand %vm349, %vm350
      %v352 = vsel %vm351, %v330, -1e+30
      %v353 = vsel %vm335, %v352, -inf
      %354 = vmax.xlane.f32.xlu0 %v353
      %v355 = vpop.xlane.xlu0 %354
      %v356 = vsub.f32 %v352, %v355
      %v357 = vmul.f32 %v356, 1.442695
      %v358 = vpow.pop %v357
      %v359 = vsel %vm351, %v358, 0.0
      %v360 = vsel %vm335, %v359, 0.0
      %361 = vadd.xlane.f32.xlu0 %v360
      %v362 = vpop.xlane.xlu0 %361
      %v363 = vrcp.pop %v362
      %v364 = vmul.f32 %v359, %v363
      %v365 = vadd.f32 %v348, %v364
      %366 = vst [vmem:[#allocation10] sm:$0x3] %v365
    $region41: #{tpu_custom_call.1} parent=1 // pred_fallthru
      _
    // Predicated region
    $region42: #{tpu_custom_call.1} parent=1 // pred_check
      _
    $region43: #{tpu_custom_call.1} parent=1 // pred_check_branch
      %368 = sbr.rel (0) target = $region45
    $region44: #{tpu_custom_call.1} parent=1 // pred_region
      %s370 = ssub.s32 32, 32
      %371 = vsyncadd [#allocation6], %s370
      %s373 = sshll.u32 [#allocation10], 4
      %s374 = int_to_ptr.vmem [resolvable:$true] %s373
      %376 = dma.vmem_to_hbm [thread:$0]  %s374, 32, %s5, [#allocation6]
    $region45: #{tpu_custom_call.1} parent=1 // pred_fallthru
      _
    // Predicated region
    $region46: #{tpu_custom_call.1} parent=1 // pred_check
      _
    $region47: #{tpu_custom_call.1} parent=1 // pred_check_branch
      %378 = sbr.rel (0) target = $region49
    $region48: #{tpu_custom_call.1} parent=1 // pred_region
      %379 = dma.done [#allocation6], 32
    $region49: #{tpu_custom_call.1} parent=1 // pred_fallthru
      _
    %380 = vsyncpa [#allocation5], 1
    %381 = vsyncpa [#allocation8], 1
    %382 = vsyncpa [#allocation6], 1

</llo_original>
